<compile_context>
chip_gen: v5e
topology: v5e:2x2
jax: 0.10.0
libtpu: 0.0.40
codegen_flags: <defaults>
</compile_context>

<pallas_src>
import jax
import jax.numpy as jnp
from jax import lax
from jax.experimental import pallas as pl
from jax.experimental.pallas import tpu as pltpu

HIDDEN_SIZES = (32, 16, 8)   # fixed inside RLCritic.__init__


def _critic_kernel(obs_ref,
                   w1_ref, b1_ref,
                   w2_ref, b2_ref,
                   w3_ref, b3_ref,
                   w4t_ref, b4_ref,
                   out_ref):
    x = obs_ref[...]
    # Layer 1: [TB, obs_dim] @ [obs_dim, 32] + [1, 32] -> tanh
    h = jnp.tanh(
        jnp.dot(x, w1_ref[...], preferred_element_type=jnp.float32)
        + b1_ref[...])
    # Layer 2: -> [TB, 16]
    h = jnp.tanh(
        jnp.dot(h, w2_ref[...], preferred_element_type=jnp.float32)
        + b2_ref[...])
    # Layer 3: -> [TB, 8]
    h = jnp.tanh(
        jnp.dot(h, w3_ref[...], preferred_element_type=jnp.float32)
        + b3_ref[...])
    # Output layer (Identity activation), computed transposed so the result is
    # a lane-dense [1, TB] row (unmasked stores + contiguous output DMA)
    # instead of a masked [TB, 1] column:
    #   v_row = w4^T @ h^T + b4,   w4t_ref is [1, 8], h is [TB, 8].
    v_row = lax.dot_general(
        w4t_ref[...], h,
        dimension_numbers=(((1,), (1,)), ((), ())),
        preferred_element_type=jnp.float32) + b4_ref[...]          # [1, TB]
    out_ref[...] = v_row[None].astype(out_ref.dtype)               # [1, 1, TB]


def _round_up(x, m):
    return ((x + m - 1) // m) * m


def _pick_tb(B, obs_dim, tb_request):
    """Pick a batch tile: big (amortize per-step overhead), multiple of 8,
    VMEM-safe on every generation, and >=2 grid steps for large batches."""
    tb = max(8, _round_up(tb_request, 8))
    # Keep the double-buffered obs tile (2 * tb * obs_dim * 4 B) <= ~8 MiB so
    # it comfortably fits v7x's scoped VMEM as well as v5e/v6e.
    while tb > 8 and 2 * tb * obs_dim * 4 > 8 * 1024 * 1024:
        tb //= 2
    tb = max(8, _round_up(tb, 8))
    # Never make the tile larger than the (8-padded) batch.
    tb = min(tb, _round_up(B, 8))
    # Keep at least 2 "parallel" grid steps when the batch is big enough, so
    # v7x's two TensorCores both get work.
    if B > 256 and pl.cdiv(B, tb) < 2:
        tb = max(128, _round_up(pl.cdiv(B, 2), 8))
    return tb


def rl_critic_forward(obs, mask, params, *, tb_request=1024):
    """Pallas forward pass of RLCritic.  `mask` is accepted but unused,
    matching the PyTorch module's forward signature."""
    del mask
    B, obs_dim = obs.shape
    (w1, b1), (w2, b2), (w3, b3), (w4, b4) = params

    tb = _pick_tb(B, obs_dim, tb_request)
    grid = pl.cdiv(B, tb)          # ragged tail tile is padded, sliced off below

    # Final layer stored transposed ([out, in] = PyTorch nn.Linear layout) so
    # the kernel can emit a lane-dense [1, TB] value row.
    w4t = jnp.transpose(w4)        # [1, 8]
    b4r = jnp.reshape(b4, (1, 1))  # [1, 1]

    # Full-array blocks with constant index_maps: weights are DMA'd once and
    # stay resident across the whole grid (no per-step re-fetch).
    weight_args = [w1, b1, w2, b2, w3, b3, w4t, b4r]
    weight_specs = [pl.BlockSpec(w.shape, lambda i: (0, 0)) for w in weight_args]

    out = pl.pallas_call(
        _critic_kernel,
        out_shape=jax.ShapeDtypeStruct((grid, 1, tb), jnp.float32),
        grid_spec=pltpu.PrefetchScalarGridSpec(
            num_scalar_prefetch=0,
            grid=(grid,),
            in_specs=[pl.BlockSpec((tb, obs_dim), lambda i: (i, 0))]
                     + weight_specs,
            out_specs=pl.BlockSpec((1, 1, tb), lambda i: (i, 0, 0)),
        ),
        compiler_params=pltpu.CompilerParams(
            dimension_semantics=("parallel",),      # batch axis -> both TCs on v7x
            vmem_limit_bytes=32 * 1024 * 1024),     # explicit budget, safe on all gens
    )(obs, *weight_args)

    # Flatten the lane-dense row tiles back to [B] (drops any padded tail rows);
    # this is the torch.squeeze(..., -1).
    return out.reshape(-1)[:B]


def init_params(key, obs_dim):
    """Deterministic init mimicking nn.Linear's default U(-1/sqrt(fan_in), ...)."""
    sizes = [obs_dim] + list(HIDDEN_SIZES) + [1]
    params = []
    for j in range(len(sizes) - 1):
        fan_in, fan_out = sizes[j], sizes[j + 1]
        key, kw, kb = jax.random.split(key, 3)
        bound = 1.0 / jnp.sqrt(fan_in)
        w = jax.random.uniform(kw, (fan_in, fan_out), jnp.float32,
                               minval=-bound, maxval=bound)
        b = jax.random.uniform(kb, (1, fan_out), jnp.float32,
                               minval=-bound, maxval=bound)
        params.append((w, b))
    return params


if __name__ == "__main__":
    key = jax.random.PRNGKey(0)
    obs_dim = 32

    k_obs, k_mask, k_params = jax.random.split(key, 3)
    params = init_params(k_params, obs_dim)

    # Pure-JAX reference.
    def ref_forward(obs, params):
        h = obs
        for idx, (w, b) in enumerate(params):
            h = h @ w + b
            if idx < len(params) - 1:
                h = jnp.tanh(h)
        return jnp.squeeze(h, -1)

    # Small batch (single tiny tile) and a ragged multi-tile batch.
    for B in (8, 1000):
        kb = jax.random.fold_in(k_obs, B)
        obs = jax.random.normal(kb, (B, obs_dim), jnp.float32)
        mask = jnp.ones((B, obs_dim), jnp.float32)   # unused by forward (as in PyTorch)

        values = rl_critic_forward(obs, mask, params)
        jax.block_until_ready(values)

        ref = ref_forward(obs, params)
        assert values.shape == (B,)
        assert jnp.allclose(values, ref, atol=1e-4, rtol=1e-4), \
            float(jnp.max(jnp.abs(values - ref)))

    print("KERNEL_OK")
</pallas_src>

<mosaic_0001>
module attributes {stable_mosaic.version = 11 : i64} {
  func.func @_critic_kernel(%arg0: i32, %arg1: memref<8x32xf32, #tpu.memory_space<vmem>>, %arg2: memref<32x32xf32, #tpu.memory_space<vmem>>, %arg3: memref<1x32xf32, #tpu.memory_space<vmem>>, %arg4: memref<32x16xf32, #tpu.memory_space<vmem>>, %arg5: memref<1x16xf32, #tpu.memory_space<vmem>>, %arg6: memref<16x8xf32, #tpu.memory_space<vmem>>, %arg7: memref<1x8xf32, #tpu.memory_space<vmem>>, %arg8: memref<1x8xf32, #tpu.memory_space<vmem>>, %arg9: memref<1x1xf32, #tpu.memory_space<vmem>>, %arg10: memref<1x1x8xf32, #tpu.memory_space<vmem>>) attributes {dimension_semantics = [#tpu.dimension_semantics<parallel>], iteration_bounds = array<i64: 1>, scalar_prefetch = 0 : i64, scratch_operands = 0 : i64, tpu.core_type = #tpu.core_type<tc>, window_params = [{transform_indices = @transform_0, window_bounds = array<i64: 8, 32>}, {pipeline_mode = #tpu.pipeline_mode<synchronous>, transform_indices = @transform_1, window_bounds = array<i64: 32, 32>}, {pipeline_mode = #tpu.pipeline_mode<synchronous>, transform_indices = @transform_2, window_bounds = array<i64: 1, 32>}, {pipeline_mode = #tpu.pipeline_mode<synchronous>, transform_indices = @transform_3, window_bounds = array<i64: 32, 16>}, {pipeline_mode = #tpu.pipeline_mode<synchronous>, transform_indices = @transform_4, window_bounds = array<i64: 1, 16>}, {pipeline_mode = #tpu.pipeline_mode<synchronous>, transform_indices = @transform_5, window_bounds = array<i64: 16, 8>}, {pipeline_mode = #tpu.pipeline_mode<synchronous>, transform_indices = @transform_6, window_bounds = array<i64: 1, 8>}, {pipeline_mode = #tpu.pipeline_mode<synchronous>, transform_indices = @transform_7, window_bounds = array<i64: 1, 8>}, {pipeline_mode = #tpu.pipeline_mode<synchronous>, transform_indices = @transform_8, window_bounds = array<i64: 1, 1>}, {transform_indices = @transform_9, window_bounds = array<i64: 1, 1, 8>}]} {
    %c0 = arith.constant 0 : index
    %c0_0 = arith.constant 0 : index
    %0 = vector.load %arg1[%c0, %c0_0] : memref<8x32xf32, #tpu.memory_space<vmem>>, vector<8x32xf32>
    %c0_1 = arith.constant 0 : index
    %c0_2 = arith.constant 0 : index
    %1 = vector.load %arg2[%c0_1, %c0_2] : memref<32x32xf32, #tpu.memory_space<vmem>>, vector<32x32xf32>
    %cst = arith.constant dense<0.000000e+00> : vector<8x32xf32>
    %2 = tpu.matmul %0, %1, %cst {dimension_numbers = #tpu.dot_dimension_numbers<[1], [0], [0], [1], [0, 0, 1, 1], [], []>} : vector<8x32xf32>, vector<32x32xf32>, vector<8x32xf32> -> vector<8x32xf32>
    %c0_3 = arith.constant 0 : index
    %c0_4 = arith.constant 0 : index
    %3 = vector.load %arg3[%c0_3, %c0_4] : memref<1x32xf32, #tpu.memory_space<vmem>>, vector<1x32xf32>
    %4 = vector.broadcast %3 : vector<1x32xf32> to vector<8x32xf32>
    %5 = arith.addf %2, %4 : vector<8x32xf32>
    %6 = math.tanh %5 : vector<8x32xf32>
    %c0_5 = arith.constant 0 : index
    %c0_6 = arith.constant 0 : index
    %7 = vector.load %arg4[%c0_5, %c0_6] : memref<32x16xf32, #tpu.memory_space<vmem>>, vector<32x16xf32>
    %cst_7 = arith.constant dense<0.000000e+00> : vector<8x16xf32>
    %8 = tpu.matmul %6, %7, %cst_7 {dimension_numbers = #tpu.dot_dimension_numbers<[1], [0], [0], [1], [0, 0, 1, 1], [], []>} : vector<8x32xf32>, vector<32x16xf32>, vector<8x16xf32> -> vector<8x16xf32>
    %c0_8 = arith.constant 0 : index
    %c0_9 = arith.constant 0 : index
    %9 = vector.load %arg5[%c0_8, %c0_9] : memref<1x16xf32, #tpu.memory_space<vmem>>, vector<1x16xf32>
    %10 = vector.broadcast %9 : vector<1x16xf32> to vector<8x16xf32>
    %11 = arith.addf %8, %10 : vector<8x16xf32>
    %12 = math.tanh %11 : vector<8x16xf32>
    %c0_10 = arith.constant 0 : index
    %c0_11 = arith.constant 0 : index
    %13 = vector.load %arg6[%c0_10, %c0_11] : memref<16x8xf32, #tpu.memory_space<vmem>>, vector<16x8xf32>
    %cst_12 = arith.constant dense<0.000000e+00> : vector<8x8xf32>
    %14 = tpu.matmul %12, %13, %cst_12 {dimension_numbers = #tpu.dot_dimension_numbers<[1], [0], [0], [1], [0, 0, 1, 1], [], []>} : vector<8x16xf32>, vector<16x8xf32>, vector<8x8xf32> -> vector<8x8xf32>
    %c0_13 = arith.constant 0 : index
    %c0_14 = arith.constant 0 : index
    %15 = vector.load %arg7[%c0_13, %c0_14] : memref<1x8xf32, #tpu.memory_space<vmem>>, vector<1x8xf32>
    %16 = vector.broadcast %15 : vector<1x8xf32> to vector<8x8xf32>
    %17 = arith.addf %14, %16 : vector<8x8xf32>
    %18 = math.tanh %17 : vector<8x8xf32>
    %c0_15 = arith.constant 0 : index
    %c0_16 = arith.constant 0 : index
    %19 = vector.load %arg8[%c0_15, %c0_16] : memref<1x8xf32, #tpu.memory_space<vmem>>, vector<1x8xf32>
    %cst_17 = arith.constant dense<0.000000e+00> : vector<1x8xf32>
    %20 = tpu.matmul %19, %18, %cst_17 {dimension_numbers = #tpu.dot_dimension_numbers<[1], [1], [0], [0], [0, 0, 1, 0], [], []>} : vector<1x8xf32>, vector<8x8xf32>, vector<1x8xf32> -> vector<1x8xf32>
    %c0_18 = arith.constant 0 : index
    %c0_19 = arith.constant 0 : index
    %21 = vector.load %arg9[%c0_18, %c0_19] : memref<1x1xf32, #tpu.memory_space<vmem>>, vector<1x1xf32>
    %22 = vector.broadcast %21 : vector<1x1xf32> to vector<1x8xf32>
    %23 = arith.addf %20, %22 : vector<1x8xf32>
    %24 = vector.shape_cast %23 : vector<1x8xf32> to vector<1x1x8xf32>
    %c0_20 = arith.constant 0 : index
    %c0_21 = arith.constant 0 : index
    %c0_22 = arith.constant 0 : index
    %25 = vector.load %arg10[%c0_20, %c0_21, %c0_22] : memref<1x1x8xf32, #tpu.memory_space<vmem>>, vector<1x1x8xf32>
    tpu.vector_store %arg10[%c0_20, %c0_21, %c0_22], %24 {strides = array<i32>} : memref<1x1x8xf32, #tpu.memory_space<vmem>>, vector<1x1x8xf32>,
    return
  }
  func.func @transform_0(%arg0: i32) -> (i32, i32) {
    %c0_i32 = arith.constant 0 : i32
    %c0_i32_0 = arith.constant 0 : i32
    return %arg0, %c0_i32 : i32, i32
  }
  func.func @transform_1(%arg0: i32) -> (i32, i32) {
    %c0_i32 = arith.constant 0 : i32
    %c0_i32_0 = arith.constant 0 : i32
    %c0_i32_1 = arith.constant 0 : i32
    return %c0_i32, %c0_i32_0 : i32, i32
  }
  func.func @transform_2(%arg0: i32) -> (i32, i32) {
    %c0_i32 = arith.constant 0 : i32
    %c0_i32_0 = arith.constant 0 : i32
    %c0_i32_1 = arith.constant 0 : i32
    return %c0_i32, %c0_i32_0 : i32, i32
  }
  func.func @transform_3(%arg0: i32) -> (i32, i32) {
    %c0_i32 = arith.constant 0 : i32
    %c0_i32_0 = arith.constant 0 : i32
    %c0_i32_1 = arith.constant 0 : i32
    return %c0_i32, %c0_i32_0 : i32, i32
  }
  func.func @transform_4(%arg0: i32) -> (i32, i32) {
    %c0_i32 = arith.constant 0 : i32
    %c0_i32_0 = arith.constant 0 : i32
    %c0_i32_1 = arith.constant 0 : i32
    return %c0_i32, %c0_i32_0 : i32, i32
  }
  func.func @transform_5(%arg0: i32) -> (i32, i32) {
    %c0_i32 = arith.constant 0 : i32
    %c0_i32_0 = arith.constant 0 : i32
    %c0_i32_1 = arith.constant 0 : i32
    return %c0_i32, %c0_i32_0 : i32, i32
  }
  func.func @transform_6(%arg0: i32) -> (i32, i32) {
    %c0_i32 = arith.constant 0 : i32
    %c0_i32_0 = arith.constant 0 : i32
    %c0_i32_1 = arith.constant 0 : i32
    return %c0_i32, %c0_i32_0 : i32, i32
  }
  func.func @transform_7(%arg0: i32) -> (i32, i32) {
    %c0_i32 = arith.constant 0 : i32
    %c0_i32_0 = arith.constant 0 : i32
    %c0_i32_1 = arith.constant 0 : i32
    return %c0_i32, %c0_i32_0 : i32, i32
  }
  func.func @transform_8(%arg0: i32) -> (i32, i32) {
    %c0_i32 = arith.constant 0 : i32
    %c0_i32_0 = arith.constant 0 : i32
    %c0_i32_1 = arith.constant 0 : i32
    return %c0_i32, %c0_i32_0 : i32, i32
  }
  func.func @transform_9(%arg0: i32) -> (i32, i32, i32) {
    %c0_i32 = arith.constant 0 : i32
    %c0_i32_0 = arith.constant 0 : i32
    %c0_i32_1 = arith.constant 0 : i32
    return %arg0, %c0_i32, %c0_i32_0 : i32, i32, i32
  }
}

</mosaic_0001>

<llo_original>
// kernel: tpu_custom_call.1
$region0: #{tpu_custom_call.1}
  #allocation0 [shape = 'u32[]', space=smem, size = 0x4, offset = 0x4, fixed_abs, tag = 'smem constant byte address 0x4 - core index']
  #allocation1 [shape = 'u32[72,128]{1,0:T(1,128)}', space=vmem, size = 0x9000, scoped, tag = 'internal scratch']
  #allocation2 [shape = 'f32[1,1]{1,0:T(1,128)S(1)}', space=vmem, size = 0x200, scoped, tag = 'scoped memory for tpu_custom_call.1']
  %s0 = inlined_call_operand.vmem [shape: f32[8,32], index: 0, kind: input, shape index: {}]
  %s1 = inlined_call_operand.vmem [shape: f32[32,32], index: 1, kind: input, shape index: {}]
  %s2 = inlined_call_operand.vmem [shape: f32[1,32], index: 2, kind: input, shape index: {}]
  %s3 = inlined_call_operand.vmem [shape: f32[32,16], index: 3, kind: input, shape index: {}]
  %s4 = inlined_call_operand.vmem [shape: f32[1,16], index: 4, kind: input, shape index: {}]
  %s5 = inlined_call_operand.vmem [shape: f32[16,8], index: 5, kind: input, shape index: {}]
  %s6 = inlined_call_operand.vmem [shape: f32[1,8], index: 6, kind: input, shape index: {}]
  %s7 = inlined_call_operand.vmem [shape: f32[1,8], index: 7, kind: input, shape index: {}]
  %s8 = inlined_call_operand.<no memory space> [shape: f32[1,1], index: 8, kind: input, shape index: {}]
  %s9 = inlined_call_operand.hbm [shape: f32[1,1,8], index: 9, kind: output, shape index: {}]
  %s10 = sld [smem:[#allocation0]]
  $region46: #{tpu_custom_call.1} parent=0
    _
  %s12 = ssub.s32 1, %s10
  %s13 = scalar_select 0, %s12, %s10
  %v14 = vstv %s8
  %15 = vst [vmem:[#allocation2] sm:$0x1] %v14
  $region1: #{tpu_custom_call.1} parent=0
    #allocation3 [shape = 'u8[512]{0}', space=vmem, size = 0x400, scoped, tag = 'output window, operand 0, single buffered']
    #allocation4 [shape = 's32[1]{0}', space=sflag, size = 0x4, scoped, tag = 'scoped memory for tpu_custom_call.1']
    %16 = vsyncpa [#allocation4], 0
    // Predicated region
    $region2: #{tpu_custom_call.1} parent=1 // pred_check
      _
    $region3: #{tpu_custom_call.1} parent=1 // pred_check_branch
      %18 = sbr.rel (0) target = $region5
    $region4: #{tpu_custom_call.1} parent=1 // pred_region
      _
    $region5: #{tpu_custom_call.1} parent=1 // pred_fallthru
      _
    // Predicated region
    $region6: #{tpu_custom_call.1} parent=1 // pred_check
      _
    $region7: #{tpu_custom_call.1} parent=1 // pred_check_branch
      %20 = sbr.rel (0) target = $region9
    $region8: #{tpu_custom_call.1} parent=1 // pred_region
      _
    $region9: #{tpu_custom_call.1} parent=1 // pred_fallthru
      _
    // Predicated region
    $region10: #{tpu_custom_call.1} parent=1 // pred_check
      _
    $region11: #{tpu_custom_call.1} parent=1 // pred_check_branch
      %22 = sbr.rel (0) target = $region13
    $region12: #{tpu_custom_call.1} parent=1 // pred_region
      _
    $region13: #{tpu_custom_call.1} parent=1 // pred_fallthru
      _
    // Predicated region
    $region14: #{tpu_custom_call.1} parent=1 // pred_check
      _
    $region15: #{tpu_custom_call.1} parent=1 // pred_check_branch
      %24 = sbr.rel (0) target = $region17
    $region16: #{tpu_custom_call.1} parent=1 // pred_region
      _
    $region17: #{tpu_custom_call.1} parent=1 // pred_fallthru
      _
    // Predicated region
    $region18: #{tpu_custom_call.1} parent=1 // pred_check
      _
    $region19: #{tpu_custom_call.1} parent=1 // pred_check_branch
      %26 = sbr.rel (0) target = $region21
    $region20: #{tpu_custom_call.1} parent=1 // pred_region
      _
    $region21: #{tpu_custom_call.1} parent=1 // pred_fallthru
      _
    // Predicated region
    $region22: #{tpu_custom_call.1} parent=1 // pred_check
      _
    $region23: #{tpu_custom_call.1} parent=1 // pred_check_branch
      %28 = sbr.rel (0) target = $region25
    $region24: #{tpu_custom_call.1} parent=1 // pred_region
      _
    $region25: #{tpu_custom_call.1} parent=1 // pred_fallthru
      _
    // Predicated region
    $region26: #{tpu_custom_call.1} parent=1 // pred_check
      _
    $region27: #{tpu_custom_call.1} parent=1 // pred_check_branch
      %30 = sbr.rel (0) target = $region29
    $region28: #{tpu_custom_call.1} parent=1 // pred_region
      _
    $region29: #{tpu_custom_call.1} parent=1 // pred_fallthru
      _
    // Predicated region
    $region30: #{tpu_custom_call.1} parent=1 // pred_check
      _
    $region31: #{tpu_custom_call.1} parent=1 // pred_check_branch
      %32 = sbr.rel (0) target = $region33
    $region32: #{tpu_custom_call.1} parent=1 // pred_region
      _
    $region33: #{tpu_custom_call.1} parent=1 // pred_fallthru
      _
    // Predicated region
    $region34: #{tpu_custom_call.1} parent=1 // pred_check
      _
    $region35: #{tpu_custom_call.1} parent=1 // pred_check_branch
      %34 = sbr.rel (0) target = $region37
    $region36: #{tpu_custom_call.1} parent=1 // pred_region
      _
    $region37: #{tpu_custom_call.1} parent=1 // pred_fallthru
      _
    %v35 = vld [vmem:[%s0] sm:$0xff]
    %v36 = vld [vmem:[%s1] sm:$0xff]
    %v37 = vld [vmem:[%s1 + $0x8] sm:$0xff]
    %v38 = vld [vmem:[%s1 + $0x10] sm:$0xff]
    %v39 = vld [vmem:[%s1 + $0x18] sm:$0xff]
    %v40 = vld [vmem:[%s2] sm:$0x1]
    %v42 = vperm.slane %v40, 0
    %vm44 = vcmask 261120
    %v46 = vsel %vm44, %v35, 0
    %48 = vmatpush.msra.mxu0 0.0
    %49 = vmatpush.msra.mxu0 0.0
    %50 = vmatpush.msra.mxu0 0.0
    %51 = vmatpush.msra.mxu0 0.0
    %52 = vmatpush.msra.mxu0 0.0
    %53 = vmatpush.msra.mxu0 0.0
    %54 = vmatpush.msra.mxu0 0.0
    %55 = vmatpush.msra.mxu0 0.0
    %56 = vmatpush.msra.mxu0 0.0
    %57 = vmatpush.msra.mxu0 0.0
    %58 = vmatpush.msra.mxu0 0.0
    %59 = vmatpush.msra.mxu0 0.0
    %60 = vmatpush.msra.mxu0 %v39
    %61 = vmatpush.msra.mxu0 %v38
    %62 = vmatpush.msra.mxu0 %v37
    %63 = vmatpush.msra.mxu0 %v36
    %64 = vmatmul.f32.gmra.mxu0 %v46
    %v65 = vpop.f32.mrf.mxu0
    %v66 = vadd.f32 %v42, %v65
    %67 = vdwg.mxu0
    %v68 = vtanh.pop %v66
    %v69 = vld [vmem:[%s3] sm:$0xff]
    %v70 = vld [vmem:[%s3 + $0x8] sm:$0xff]
    %v71 = vld [vmem:[%s3 + $0x10] sm:$0xff]
    %v72 = vld [vmem:[%s3 + $0x18] sm:$0xff]
    %v73 = vld [vmem:[%s4] sm:$0x1]
    %v75 = vperm.slane %v73, 0
    %v78 = vsel %vm44, %v68, 0
    %80 = vmatpush.msra.mxu0 0.0
    %81 = vmatpush.msra.mxu0 0.0
    %82 = vmatpush.msra.mxu0 0.0
    %83 = vmatpush.msra.mxu0 0.0
    %84 = vmatpush.msra.mxu0 0.0
    %85 = vmatpush.msra.mxu0 0.0
    %86 = vmatpush.msra.mxu0 0.0
    %87 = vmatpush.msra.mxu0 0.0
    %88 = vmatpush.msra.mxu0 0.0
    %89 = vmatpush.msra.mxu0 0.0
    %90 = vmatpush.msra.mxu0 0.0
    %91 = vmatpush.msra.mxu0 0.0
    %92 = vmatpush.msra.mxu0 %v72
    %93 = vmatpush.msra.mxu0 %v71
    %94 = vmatpush.msra.mxu0 %v70
    %95 = vmatpush.msra.mxu0 %v69
    %96 = vmatmul.f32.gmra.mxu0 %v78
    %v97 = vpop.f32.mrf.mxu0
    %v98 = vadd.f32 %v75, %v97
    %99 = vdwg.mxu0
    %v100 = vtanh.pop %v98
    %v101 = vld [vmem:[%s5] sm:$0xff]
    %v102 = vld [vmem:[%s5 + $0x8] sm:$0xff]
    %v103 = vld [vmem:[%s6] sm:$0x1]
    %v105 = vperm.slane %v103, 0
    %vm107 = vcmask 130048
    %v109 = vsel %vm107, %v100, 0
    %111 = vmatpush.msra.mxu0 0.0
    %112 = vmatpush.msra.mxu0 0.0
    %113 = vmatpush.msra.mxu0 0.0
    %114 = vmatpush.msra.mxu0 0.0
    %115 = vmatpush.msra.mxu0 0.0
    %116 = vmatpush.msra.mxu0 0.0
    %117 = vmatpush.msra.mxu0 0.0
    %118 = vmatpush.msra.mxu0 0.0
    %119 = vmatpush.msra.mxu0 0.0
    %120 = vmatpush.msra.mxu0 0.0
    %121 = vmatpush.msra.mxu0 0.0
    %122 = vmatpush.msra.mxu0 0.0
    %123 = vmatpush.msra.mxu0 0.0
    %124 = vmatpush.msra.mxu0 0.0
    %125 = vmatpush.msra.mxu0 %v102
    %126 = vmatpush.msra.mxu0 %v101
    %127 = vmatmul.f32.gmra.mxu0 %v109
    %v128 = vpop.f32.mrf.mxu0
    %v129 = vadd.f32 %v105, %v128
    %130 = vdwg.mxu0
    %v131 = vtanh.pop %v129
    %v132 = vld [vmem:[%s7] sm:$0x1]
    %v133 = vld [vmem:[#allocation2] sm:$0x1]
    %135 = vset.pattern.permute.xlu0 0
    %136 = vperm.xlu0 %135, %v133
    %v137 = vpop.permute.xlu0 %136
    %v139 = vperm.slane %v137, 0
    %vm140 = vcmask 64512
    %v142 = vsel %vm140, %v132, 0
    %v145 = vsel %vm140, %v131, 0
    %147 = vmatpush.xpose.msra.mxu0 0.0
    %148 = vmatpush.xpose.msra.mxu0 0.0
    %149 = vmatpush.xpose.msra.mxu0 0.0
    %150 = vmatpush.xpose.msra.mxu0 0.0
    %151 = vmatpush.xpose.msra.mxu0 0.0
    %152 = vmatpush.xpose.msra.mxu0 0.0
    %153 = vmatpush.xpose.msra.mxu0 0.0
    %154 = vmatpush.xpose.msra.mxu0 0.0
    %155 = vmatpush.xpose.msra.mxu0 0.0
    %156 = vmatpush.xpose.msra.mxu0 0.0
    %157 = vmatpush.xpose.msra.mxu0 0.0
    %158 = vmatpush.xpose.msra.mxu0 0.0
    %159 = vmatpush.xpose.msra.mxu0 0.0
    %160 = vmatpush.xpose.msra.mxu0 0.0
    %161 = vmatpush.xpose.msra.mxu0 0.0
    %162 = vmatpush.xpose.msra.mxu0 %v145
    %163 = vmatmul.f32.gmra.mxu0 %v142
    %v164 = vpop.f32.mrf.mxu0
    %v165 = vadd.f32 %v139, %v164
    %166 = vdwg.mxu0
    %vm167 = vcmask 57344
    %168 = vst.msk [vmem:[#allocation3] sm:$0x1] %vm167, %v165
    // Predicated region
    $region38: #{tpu_custom_call.1} parent=1 // pred_check
      _
    $region39: #{tpu_custom_call.1} parent=1 // pred_check_branch
      %170 = sbr.rel (0) target = $region41
    $region40: #{tpu_custom_call.1} parent=1 // pred_region
      %172 = vsyncadd [#allocation4], 0
      %s174 = sshll.u32 [#allocation3], 4
      %s175 = int_to_ptr.vmem [resolvable:$true] %s174
      %s176 = sshll.u32 %s9, 4
      %s177 = int_to_ptr.hbm [resolvable:$true] %s176
      %179 = dma.vmem_to_hbm [thread:$0]  %s175, 16, %s177, [#allocation4]
    $region41: #{tpu_custom_call.1} parent=1 // pred_fallthru
      _
    // Predicated region
    $region42: #{tpu_custom_call.1} parent=1 // pred_check
      _
    $region43: #{tpu_custom_call.1} parent=1 // pred_check_branch
      %181 = sbr.rel (0) target = $region45
    $region44: #{tpu_custom_call.1} parent=1 // pred_region
      %183 = dma.done [#allocation4], 16
    $region45: #{tpu_custom_call.1} parent=1 // pred_fallthru
      _
    %184 = vsyncpa [#allocation4], 1

</llo_original>
